<compile_context>
chip_gen: v5e
topology: v5e:2x2
jax: 0.10.0
libtpu: 0.0.40
codegen_flags: <defaults>
</compile_context>

<pallas_src>
import functools

import jax
import jax.numpy as jnp
from jax.experimental import pallas as pl
from jax.experimental.pallas import tpu as pltpu


def _inverse_term_kernel(factor_ref, x_ref, o_ref):
    # factor_ref: SMEM scalar parameter, shape (1,), f32
    # x_ref / o_ref: VMEM tiles, shape (tile_rows, lanes), native dtype
    x = x_ref[...].astype(jnp.float32)
    o_ref[...] = (factor_ref[0] * pl.reciprocal(x, approx=False)).astype(o_ref.dtype)


_LANE_CANDIDATES = (1024, 512, 256, 128)   # wider lanes -> larger contiguous DMAs


@functools.lru_cache(maxsize=1)
def _tpu_config():
    """Returns (target_block_bytes, vmem_limit_bytes, tensorcores_per_chip)."""
    vmem_phys = None
    try:
        vmem_phys = int(pltpu.get_tpu_info().vmem_capacity_bytes)
    except Exception:
        vmem_phys = None
    kind = ""
    try:
        kind = jax.devices()[0].device_kind.lower()
    except Exception:
        kind = ""
    # v7x: 64 MiB physical VMEM per TC, ~3 TB/s HBM, 2 TensorCores per chip.
    is_v7 = ("v7" in kind) or (vmem_phys is not None and vmem_phys <= (96 << 20))
    if is_v7:
        return 4 << 20, 40 << 20, 2
    # v5e / v6e: 128 MiB physical VMEM, 1 TensorCore per chip.
    return 4 << 20, 64 << 20, 1


def _choose_lanes(n: int) -> int:
    for cand in _LANE_CANDIDATES:
        if n % cand == 0:
            return cand
    return 128   # ragged fallback: kernel runs on the 128-divisible prefix


def _choose_tile_rows(n_rows: int, lanes: int, itemsize: int,
                      target_bytes: int, num_tc: int) -> int:
    # Native sublane packing: 8 (f32), 16 (bf16/f16), 32 (int8/fp8) so packed
    # stores on every block stay unmasked.
    pack = max(8, 32 // itemsize)
    max_tile_rows = max(pack, (target_bytes // (lanes * itemsize)) // pack * pack)
    if n_rows <= max_tile_rows:
        tile_rows = n_rows                        # single block = full extent
        # v7x megacore: force >=2 grid steps for mid-size tensors so both
        # TensorCores issue DMAs (only when the split is clean -> no masking).
        if (num_tc >= 2
                and n_rows * lanes * itemsize > (2 << 20)
                and n_rows % (2 * pack) == 0):
            tile_rows = n_rows // 2
        return tile_rows
    return max_tile_rows


def _run_slab(slab: jax.Array, factor32: jax.Array, tile_rows: int,
              lanes: int, vmem_limit: int) -> jax.Array:
    rows = slab.shape[0]
    grid = (pl.cdiv(rows, tile_rows),)            # partial last block is masked
    return pl.pallas_call(
        _inverse_term_kernel,
        out_shape=jax.ShapeDtypeStruct((rows, lanes), slab.dtype),
        grid_spec=pl.GridSpec(
            grid=grid,
            in_specs=[
                pl.BlockSpec(memory_space=pltpu.SMEM),               # factor (1,)
                pl.BlockSpec((tile_rows, lanes), lambda i: (i, 0)),  # x slab
            ],
            out_specs=pl.BlockSpec((tile_rows, lanes), lambda i: (i, 0)),
        ),
        compiler_params=pltpu.CompilerParams(
            dimension_semantics=("parallel",),    # megacore-shard the row axis
            vmem_limit_bytes=vmem_limit,
        ),
    )(factor32, slab)


def inverse_term_forward(x: jax.Array, factor: jax.Array,
                         *, block_bytes: int | None = None) -> jax.Array:
    """Compute factor / x elementwise with a Pallas TPU kernel.

    x: any-shape float array (e.g. NCHW [B, C, H, W]); output keeps x's dtype.
    factor: shape (1,) float parameter.
    block_bytes: optional override of the per-block byte budget (testing).
    """
    orig_shape = x.shape
    dtype = x.dtype
    n = x.size
    itemsize = jnp.dtype(dtype).itemsize

    target_bytes, vmem_limit, num_tc = _tpu_config()
    if block_bytes is not None:
        target_bytes = block_bytes

    factor32 = factor.astype(jnp.float32).reshape((1,))
    flat = x.reshape(-1)                           # free for contiguous inputs

    lanes = _choose_lanes(n)
    rows = n // lanes
    main = rows * lanes

    if rows == 0:
        # Tiny input (< 128 elements): not worth a kernel launch.
        return (factor32[0] / flat.astype(jnp.float32)).astype(dtype).reshape(orig_shape)

    tile_rows = _choose_tile_rows(rows, lanes, itemsize, target_bytes, num_tc)

    if main == n:
        # Common path: zero-copy reshape, no padding anywhere.
        slab = flat.reshape(rows, lanes)
        out = _run_slab(slab, factor32, tile_rows, lanes, vmem_limit).reshape(-1)
        return out.reshape(orig_shape)

    # Ragged path: kernel on the lanes-divisible prefix, trivial jnp on the
    # (<128-element) tail.  Avoids the full-array jnp.pad / out[:n] passes.
    main_slab = flat[:main].reshape(rows, lanes)
    main_out = _run_slab(main_slab, factor32, tile_rows, lanes, vmem_limit).reshape(-1)
    tail_out = (factor32[0] / flat[main:].astype(jnp.float32)).astype(dtype)
    return jnp.concatenate([main_out, tail_out]).reshape(orig_shape)


if __name__ == "__main__":
    key = jax.random.PRNGKey(0)
    k_factor, k_x = jax.random.split(key)

    # Deterministic "parameter" init: factor ~ randn((1,))
    factor = jax.random.normal(k_factor, (1,), dtype=jnp.float32)

    # Primary: small NCHW input (size divisible by 1024 -> zero-copy reshape path).
    x = jax.random.normal(k_x, (2, 4, 16, 16), dtype=jnp.float32)
    x = jnp.where(jnp.abs(x) < 1e-3, 1e-3, x)          # keep away from exact zero
    out = jax.block_until_ready(inverse_term_forward(x, factor))
    ref = factor[0] / x
    assert out.shape == x.shape and out.dtype == x.dtype
    assert jnp.allclose(out, ref, rtol=1e-5, atol=1e-6)

    # bf16 input: slab stays bf16 in HBM, divide done in f32 inside the vreg.
    # (Note: PyTorch type promotion would give f32 here; keeping the input
    #  dtype is an intentional bandwidth choice.)
    xb = x.astype(jnp.bfloat16)
    outb = jax.block_until_ready(inverse_term_forward(xb, factor))
    refb = (factor[0] / xb.astype(jnp.float32)).astype(jnp.bfloat16)
    assert outb.dtype == jnp.bfloat16
    assert jnp.allclose(outb.astype(jnp.float32), refb.astype(jnp.float32),
                        rtol=2e-2, atol=1e-3)

    # Awkward size: exercises the prefix + tiny-tail fallback (no full-array pad).
    x2 = jax.random.normal(jax.random.PRNGKey(1), (3, 5, 7, 11), dtype=jnp.float32)
    x2 = jnp.where(jnp.abs(x2) < 1e-3, 1e-3, x2)
    out2 = jax.block_until_ready(inverse_term_forward(x2, factor))
    assert out2.shape == x2.shape
    assert jnp.allclose(out2, factor[0] / x2, rtol=1e-5, atol=1e-6)

    # Multi-step grid with a partial (masked) last block: 40960 elems, lanes=1024,
    # rows=40, forced block_bytes=64 KiB -> tile_rows=16 -> grid=3, last block ragged.
    x3 = jax.random.normal(jax.random.PRNGKey(2), (5, 8, 32, 32), dtype=jnp.float32)
    x3 = jnp.where(jnp.abs(x3) < 1e-3, 1e-3, x3)
    out3 = jax.block_until_ready(
        inverse_term_forward(x3, factor, block_bytes=64 * 1024))
    assert jnp.allclose(out3, factor[0] / x3, rtol=1e-5, atol=1e-6)

    print("KERNEL_OK")
</pallas_src>

<mosaic_0001>
module attributes {stable_mosaic.version = 11 : i64} {
  func.func @_inverse_term_kernel(%arg0: i32, %arg1: memref<1xf32, #tpu.memory_space<smem>>, %arg2: memref<2x1024xf32, #tpu.memory_space<vmem>>, %arg3: memref<2x1024xf32, #tpu.memory_space<vmem>>) attributes {dimension_semantics = [#tpu.dimension_semantics<parallel>], iteration_bounds = array<i64: 1>, scalar_prefetch = 0 : i64, scratch_operands = 0 : i64, tpu.core_type = #tpu.core_type<tc>, window_params = [{transform_indices = @transform_0, window_bounds = array<i64: 1>}, {transform_indices = @transform_1, window_bounds = array<i64: 2, 1024>}, {transform_indices = @transform_2, window_bounds = array<i64: 2, 1024>}]} {
    %c0 = arith.constant 0 : index
    %c0_0 = arith.constant 0 : index
    %0 = vector.load %arg2[%c0, %c0_0] : memref<2x1024xf32, #tpu.memory_space<vmem>>, vector<2x1024xf32>
    %c0_1 = arith.constant 0 : index
    %1 = memref.load %arg1[%c0_1] : memref<1xf32, #tpu.memory_space<smem>>
    %2 = tpu.reciprocal %0 : vector<2x1024xf32> -> vector<2x1024xf32>
    %3 = vector.broadcast %1 : f32 to vector<2x1024xf32>
    %4 = arith.mulf %3, %2 : vector<2x1024xf32>
    %c0_2 = arith.constant 0 : index
    %c0_3 = arith.constant 0 : index
    %5 = vector.load %arg3[%c0_2, %c0_3] : memref<2x1024xf32, #tpu.memory_space<vmem>>, vector<2x1024xf32>
    tpu.vector_store %arg3[%c0_2, %c0_3], %4 {strides = array<i32>} : memref<2x1024xf32, #tpu.memory_space<vmem>>, vector<2x1024xf32>,
    return
  }
  func.func @transform_0(%arg0: i32) -> i32 {
    %c0_i32 = arith.constant 0 : i32
    %c0_i32_0 = arith.constant 0 : i32
    return %c0_i32 : i32
  }
  func.func @transform_1(%arg0: i32) -> (i32, i32) {
    %c0_i32 = arith.constant 0 : i32
    %c0_i32_0 = arith.constant 0 : i32
    return %arg0, %c0_i32 : i32, i32
  }
  func.func @transform_2(%arg0: i32) -> (i32, i32) {
    %c0_i32 = arith.constant 0 : i32
    %c0_i32_0 = arith.constant 0 : i32
    return %arg0, %c0_i32 : i32, i32
  }
}

</mosaic_0001>

<llo_original>
// kernel: tpu_custom_call.1
$region0: #{tpu_custom_call.1}
  #allocation0 [shape = 'u32[]', space=smem, size = 0x4, offset = 0x4, fixed_abs, tag = 'smem constant byte address 0x4 - core index']
  #allocation1 [shape = 'u32[72,128]{1,0:T(1,128)}', space=vmem, size = 0x9000, scoped, tag = 'internal scratch']
  #allocation2 [shape = 'f32[1]{0:T(128)S(6)}', space=smem, size = 0x200, scoped, tag = 'scoped memory for tpu_custom_call.1']
  %s0 = inlined_call_operand.<no memory space> [shape: f32[1], index: 0, kind: input, shape index: {}]
  %s1 = inlined_call_operand.hbm [shape: f32[2,1024], index: 1, kind: input, shape index: {}]
  %s2 = inlined_call_operand.hbm [shape: f32[2,1024], index: 2, kind: output, shape index: {}]
  %s3 = sld [smem:[#allocation0]]
  $region22: #{tpu_custom_call.1} parent=0
    _
  %s5 = ssub.s32 1, %s3
  %s6 = scalar_select 0, %s5, %s3
  %7 = sst [smem:[#allocation2]] %s0
  $region1: #{tpu_custom_call.1} parent=0
    #allocation3 [shape = 'u8[8192]{0}', space=vmem, size = 0x2000, scoped, tag = 'input window, operand 1, single buffered']
    #allocation4 [shape = 's32[1]{0}', space=sflag, size = 0x4, scoped, tag = 'scoped memory for tpu_custom_call.1']
    #allocation5 [shape = 's32[1]{0}', space=sflag, size = 0x4, scoped, tag = 'scoped memory for tpu_custom_call.1']
    #allocation6 [shape = 'u8[8192]{0}', space=vmem, size = 0x2000, scoped, tag = 'output window, operand 0, single buffered']
    %8 = vsyncpa [#allocation4], 0
    %9 = vsyncpa [#allocation5], 0
    // Predicated region
    $region2: #{tpu_custom_call.1} parent=1 // pred_check
      _
    $region3: #{tpu_custom_call.1} parent=1 // pred_check_branch
      %11 = sbr.rel (0) target = $region5
    $region4: #{tpu_custom_call.1} parent=1 // pred_region
      _
    $region5: #{tpu_custom_call.1} parent=1 // pred_fallthru
      _
    // Predicated region
    $region6: #{tpu_custom_call.1} parent=1 // pred_check
      _
    $region7: #{tpu_custom_call.1} parent=1 // pred_check_branch
      %13 = sbr.rel (0) target = $region9
    $region8: #{tpu_custom_call.1} parent=1 // pred_region
      %15 = vsyncadd [#allocation4], 0
      %s17 = sshll.u32 %s1, 4
      %s18 = int_to_ptr.hbm [resolvable:$true] %s17
      %s19 = sshll.u32 [#allocation3], 4
      %s20 = int_to_ptr.vmem [resolvable:$true] %s19
      %22 = dma.hbm_to_vmem [thread:$0]  %s18, 256, %s20, [#allocation4]
    $region9: #{tpu_custom_call.1} parent=1 // pred_fallthru
      _
    // Predicated region
    $region10: #{tpu_custom_call.1} parent=1 // pred_check
      _
    $region11: #{tpu_custom_call.1} parent=1 // pred_check_branch
      %24 = sbr.rel (0) target = $region13
    $region12: #{tpu_custom_call.1} parent=1 // pred_region
      %26 = dma.done [#allocation4], 256
    $region13: #{tpu_custom_call.1} parent=1 // pred_fallthru
      _
    %v27 = vld [vmem:[#allocation3] sm:$0xff]
    %v28 = vld [vmem:[#allocation3 + $0x8] sm:$0xff]
    %s29 = sld [smem:[#allocation2]]
    %v30 = vrcp.pop %v27
    %v31 = vmul.f32 %v27, %v30
    %v32 = vsub.f32 1.0, %v31
    %v33 = vmul.f32 %v30, %v32
    %v34 = vadd.f32 %v30, %v33
    %vm35 = vweird.f32 %v27
    %vm36 = vweird.f32 %v30
    %vm37 = vmor %vm35, %vm36
    %v38 = vsel %vm37, %v30, %v34
    %v39 = vand.u32 2147483647, %v27
    %vm40 = vcmp.eq.f32.partialorder %v39, 8.507059e+37
    %v41 = vand.u32 %v27, 2147483648
    %v42 = vor.u32 1.1754944e-38, %v41
    %v43 = vsel %vm40, %v42, %v38
    %v44 = vrcp.pop %v28
    %v45 = vmul.f32 %v28, %v44
    %v46 = vsub.f32 1.0, %v45
    %v47 = vmul.f32 %v44, %v46
    %v48 = vadd.f32 %v44, %v47
    %vm49 = vweird.f32 %v28
    %vm50 = vweird.f32 %v44
    %vm51 = vmor %vm49, %vm50
    %v52 = vsel %vm51, %v44, %v48
    %v53 = vand.u32 2147483647, %v28
    %vm54 = vcmp.eq.f32.partialorder %v53, 8.507059e+37
    %v55 = vand.u32 %v28, 2147483648
    %v56 = vor.u32 1.1754944e-38, %v55
    %v57 = vsel %vm54, %v56, %v52
    %v58 = vstv %s29
    %v59 = vmul.f32 %v58, %v43
    %v60 = vmul.f32 %v58, %v57
    %61 = vst [vmem:[#allocation6] sm:$0xff] %v59
    %62 = vst [vmem:[#allocation6 + $0x8] sm:$0xff] %v60
    // Predicated region
    $region14: #{tpu_custom_call.1} parent=1 // pred_check
      _
    $region15: #{tpu_custom_call.1} parent=1 // pred_check_branch
      %64 = sbr.rel (0) target = $region17
    $region16: #{tpu_custom_call.1} parent=1 // pred_region
      %66 = vsyncadd [#allocation5], 0
      %s68 = sshll.u32 [#allocation6], 4
      %s69 = int_to_ptr.vmem [resolvable:$true] %s68
      %s70 = sshll.u32 %s2, 4
      %s71 = int_to_ptr.hbm [resolvable:$true] %s70
      %73 = dma.vmem_to_hbm [thread:$0]  %s69, 256, %s71, [#allocation5]
    $region17: #{tpu_custom_call.1} parent=1 // pred_fallthru
      _
    // Predicated region
    $region18: #{tpu_custom_call.1} parent=1 // pred_check
      _
    $region19: #{tpu_custom_call.1} parent=1 // pred_check_branch
      %75 = sbr.rel (0) target = $region21
    $region20: #{tpu_custom_call.1} parent=1 // pred_region
      %77 = dma.done [#allocation5], 256
    $region21: #{tpu_custom_call.1} parent=1 // pred_fallthru
      _
    %78 = vsyncpa [#allocation4], 1
    %79 = vsyncpa [#allocation5], 1

</llo_original>
